<compile_context>
chip_gen: v7x
topology: tpu7x:2x2x1
jax: 0.10.0
libtpu: 0.0.40
codegen_flags: <defaults>
</compile_context>

<pallas_src>
import jax
import jax.numpy as jnp
from jax.experimental import pallas as pl
from jax.experimental.pallas import tpu as pltpu


def _round_up(x: int, m: int) -> int:
    return (x + m - 1) // m * m


# ---------------------------------------------------------------------------
# Tiling knobs
# ---------------------------------------------------------------------------
_TILES_PER_BATCH = 8     # aim for ~8 spatial tiles per batch element
_MIN_TILE_ROWS = 16      # 16 rows x 128 lanes = 2048 lanes minimum per tile
_MAX_TILE_ROWS = 256     # 256 rows -> 512 KiB x-block (Cin=4, f32)
_MIN_TILE_P = 2048       # flat-path equivalents (lanes)
_MAX_TILE_P = 32768


# ---------------------------------------------------------------------------
# Kernels
# ---------------------------------------------------------------------------
def _conv1x1_axpy_kernel(x_ref, w_ref, b_ref, o_ref):
    """Sublane-dense 1x1 conv block as unrolled VPU AXPYs.

    x_ref: (1, Cin, TR, 128) VMEM
    w_ref: (Cout*Cin,)       SMEM scalars (row-major: w[o, c] = w_ref[o*Cin+c])
    b_ref: (Cout,)           SMEM scalars
    o_ref: (1, Cout, TR, 128) VMEM
    """
    cin = x_ref.shape[1]
    cout = o_ref.shape[1]
    for o in range(cout):
        acc = x_ref[0, 0] * w_ref[o * cin] + b_ref[o]
        for c in range(1, cin):
            acc = acc + x_ref[0, c] * w_ref[o * cin + c]
        o_ref[0, o] = acc.astype(o_ref.dtype)


def _conv1x1_dot_kernel(x_ref, w_ref, b_ref, o_ref):
    """Fallback (spatial not a multiple of 128): flat spatial on lanes, MXU dot.

    x_ref: (1, Cin, TP)   w_ref: (Cout, Cin)   b_ref: (Cout, 1)
    o_ref: (1, Cout, TP)
    """
    o_ref[0] = (
        jnp.dot(w_ref[...], x_ref[0], preferred_element_type=jnp.float32)
        + b_ref[...]
    ).astype(o_ref.dtype)


# ---------------------------------------------------------------------------
# Wrapper
# ---------------------------------------------------------------------------
def conv1x1_nchw_pallas(x, weight, bias):
    """1x1 conv kept in NCHW via Pallas.

    x: (N, Cin, H, W) f32, weight: (Cout, Cin, 1, 1) f32, bias: (Cout,) f32.
    Returns (N, Cout, H, W) f32.
    """
    n, cin, h, w = x.shape
    cout = weight.shape[0]
    p = h * w
    w_mat = weight[:, :, 0, 0]  # (Cout, Cin)

    cost = pl.CostEstimate(
        flops=2 * n * p * cin * cout,
        transcendentals=0,
        bytes_accessed=4 * (n * cin * p + cout * cin + cout + n * cout * p),
    )

    if p % 128 == 0:
        # ---- Main path: sublane-dense (rows, 128) layout + VPU AXPYs ----
        rows = p // 128
        if rows <= _MIN_TILE_ROWS:
            tile_rows = rows  # single full-extent block along rows (legal)
        else:
            tile_rows = min(
                _MAX_TILE_ROWS,
                max(_MIN_TILE_ROWS,
                    _round_up(pl.cdiv(rows, _TILES_PER_BATCH), 8)),
            )
        grid = (n, pl.cdiv(rows, tile_rows))

        x4 = x.reshape(n, cin, rows, 128)        # free (contiguous) reshape
        w_flat = w_mat.reshape(cout * cin)       # scalars for SMEM

        out4 = pl.pallas_call(
            _conv1x1_axpy_kernel,
            out_shape=jax.ShapeDtypeStruct((n, cout, rows, 128), jnp.float32),
            grid_spec=pltpu.PrefetchScalarGridSpec(
                num_scalar_prefetch=0,
                grid=grid,
                in_specs=[
                    pl.BlockSpec((1, cin, tile_rows, 128),
                                 lambda ni, ri: (ni, 0, ri, 0)),
                    # Tiny weight / bias live in SMEM and are read as scalars.
                    pl.BlockSpec(memory_space=pltpu.MemorySpace.SMEM),
                    pl.BlockSpec(memory_space=pltpu.MemorySpace.SMEM),
                ],
                out_specs=pl.BlockSpec((1, cout, tile_rows, 128),
                                       lambda ni, ri: (ni, 0, ri, 0)),
            ),
            compiler_params=pltpu.CompilerParams(
                dimension_semantics=("parallel", "parallel"),
            ),
            cost_estimate=cost,
        )(x4, w_flat, bias)
        return out4.reshape(n, cout, h, w)

    # ---- Fallback path: flat spatial on lanes, no pad (Pallas clips) ----
    tile_p = min(_MAX_TILE_P,
                 max(_MIN_TILE_P, _round_up(pl.cdiv(p, _TILES_PER_BATCH), 128)))
    tile_p = min(tile_p, _round_up(p, 128))
    grid = (n, pl.cdiv(p, tile_p))

    x3 = x.reshape(n, cin, p)                    # free reshape, stays NCHW
    b_mat = bias.reshape(cout, 1)                # broadcast along lanes

    out3 = pl.pallas_call(
        _conv1x1_dot_kernel,
        out_shape=jax.ShapeDtypeStruct((n, cout, p), jnp.float32),
        grid_spec=pltpu.PrefetchScalarGridSpec(
            num_scalar_prefetch=0,
            grid=grid,
            in_specs=[
                pl.BlockSpec((1, cin, tile_p), lambda ni, pi: (ni, 0, pi)),
                pl.BlockSpec((cout, cin), lambda ni, pi: (0, 0)),
                pl.BlockSpec((cout, 1), lambda ni, pi: (0, 0)),
            ],
            out_specs=pl.BlockSpec((1, cout, tile_p), lambda ni, pi: (ni, 0, pi)),
        ),
        compiler_params=pltpu.CompilerParams(
            dimension_semantics=("parallel", "parallel"),
        ),
        cost_estimate=cost,
    )(x3, w_mat, b_mat)
    return out3.reshape(n, cout, h, w)


class DummyUNetPallas:
    """JAX/Pallas equivalent of the PyTorch DummyUNet (Conv2d kernel-size 1)."""

    def __init__(self, in_channels=4, out_channels=4, key=jax.random.PRNGKey(42)):
        kw, kb = jax.random.split(key)
        bound = 1.0 / jnp.sqrt(jnp.float32(in_channels))
        # weight stored PyTorch-style: (C_out, C_in, 1, 1)
        self.weight = jax.random.uniform(
            kw, (out_channels, in_channels, 1, 1), jnp.float32, -bound, bound
        )
        self.bias = jax.random.uniform(
            kb, (out_channels,), jnp.float32, -bound, bound
        )
        self._fwd = jax.jit(conv1x1_nchw_pallas)

    def __call__(self, x, timestep=None, context=None):
        # timestep and context are ignored, matching the PyTorch forward.
        return self._fwd(x, self.weight, self.bias)


if __name__ == "__main__":
    key = jax.random.PRNGKey(0)
    kx, kt, kc, kx2 = jax.random.split(key, 4)

    N, C, H, W = 2, 4, 16, 16
    x = jax.random.normal(kx, (N, C, H, W), jnp.float32)
    timestep = jax.random.randint(kt, (N,), 0, 1000)          # ignored
    context = jax.random.normal(kc, (N, 8, 32), jnp.float32)  # ignored

    model = DummyUNetPallas(in_channels=C, out_channels=C)
    out = jax.block_until_ready(model(x, timestep, context))

    w2d = model.weight[:, :, 0, 0]
    ref = jnp.einsum("nchw,oc->nohw", x, w2d) + model.bias[None, :, None, None]
    assert out.shape == (N, C, H, W)
    assert jnp.allclose(out, ref, atol=1e-5, rtol=1e-5)

    # Spatial size NOT a multiple of 128 -> exercises the pad-free fallback
    # path (partial final block clipped by Pallas, no wrapper pad/slice).
    N2, H2, W2 = 1, 17, 19
    x2 = jax.random.normal(kx2, (N2, C, H2, W2), jnp.float32)
    out2 = jax.block_until_ready(model(x2, None, None))
    ref2 = jnp.einsum("nchw,oc->nohw", x2, w2d) + model.bias[None, :, None, None]
    assert out2.shape == (N2, C, H2, W2)
    assert jnp.allclose(out2, ref2, atol=1e-5, rtol=1e-5)

    print("KERNEL_OK")
</pallas_src>

<mosaic_0001>
module attributes {stable_mosaic.version = 11 : i64} {
  func.func @_conv1x1_axpy_kernel(%arg0: i32, %arg1: i32, %arg2: memref<1x4x2x128xf32, #tpu.memory_space<vmem>>, %arg3: memref<16xf32, #tpu.memory_space<smem>>, %arg4: memref<4xf32, #tpu.memory_space<smem>>, %arg5: memref<1x4x2x128xf32, #tpu.memory_space<vmem>>) attributes {dimension_semantics = [#tpu.dimension_semantics<parallel>, #tpu.dimension_semantics<parallel>], iteration_bounds = array<i64: 2, 1>, scalar_prefetch = 0 : i64, scratch_operands = 0 : i64, tpu.core_type = #tpu.core_type<tc>, window_params = [{transform_indices = @transform_0, window_bounds = array<i64: 1, 4, 2, 128>}, {transform_indices = @transform_1, window_bounds = array<i64: 16>}, {transform_indices = @transform_2, window_bounds = array<i64: 4>}, {transform_indices = @transform_3, window_bounds = array<i64: 1, 4, 2, 128>}]} {
    %c0 = arith.constant 0 : index
    %c0_0 = arith.constant 0 : index
    %c0_1 = arith.constant 0 : index
    %c0_2 = arith.constant 0 : index
    %0 = vector.load %arg2[%c0, %c0_0, %c0_1, %c0_2] : memref<1x4x2x128xf32, #tpu.memory_space<vmem>>, vector<1x1x2x128xf32>
    %1 = vector.shape_cast %0 : vector<1x1x2x128xf32> to vector<2x128xf32>
    %c0_3 = arith.constant 0 : index
    %2 = memref.load %arg3[%c0_3] : memref<16xf32, #tpu.memory_space<smem>>
    %3 = vector.broadcast %2 : f32 to vector<2x128xf32>
    %4 = arith.mulf %1, %3 : vector<2x128xf32>
    %c0_4 = arith.constant 0 : index
    %5 = memref.load %arg4[%c0_4] : memref<4xf32, #tpu.memory_space<smem>>
    %6 = vector.broadcast %5 : f32 to vector<2x128xf32>
    %7 = arith.addf %4, %6 : vector<2x128xf32>
    %c0_5 = arith.constant 0 : index
    %c1 = arith.constant 1 : index
    %c0_6 = arith.constant 0 : index
    %c0_7 = arith.constant 0 : index
    %8 = vector.load %arg2[%c0_5, %c1, %c0_6, %c0_7] : memref<1x4x2x128xf32, #tpu.memory_space<vmem>>, vector<1x1x2x128xf32>
    %9 = vector.shape_cast %8 : vector<1x1x2x128xf32> to vector<2x128xf32>
    %c1_8 = arith.constant 1 : index
    %10 = memref.load %arg3[%c1_8] : memref<16xf32, #tpu.memory_space<smem>>
    %11 = vector.broadcast %10 : f32 to vector<2x128xf32>
    %12 = arith.mulf %9, %11 : vector<2x128xf32>
    %13 = arith.addf %7, %12 : vector<2x128xf32>
    %c0_9 = arith.constant 0 : index
    %c2 = arith.constant 2 : index
    %c0_10 = arith.constant 0 : index
    %c0_11 = arith.constant 0 : index
    %14 = vector.load %arg2[%c0_9, %c2, %c0_10, %c0_11] : memref<1x4x2x128xf32, #tpu.memory_space<vmem>>, vector<1x1x2x128xf32>
    %15 = vector.shape_cast %14 : vector<1x1x2x128xf32> to vector<2x128xf32>
    %c2_12 = arith.constant 2 : index
    %16 = memref.load %arg3[%c2_12] : memref<16xf32, #tpu.memory_space<smem>>
    %17 = vector.broadcast %16 : f32 to vector<2x128xf32>
    %18 = arith.mulf %15, %17 : vector<2x128xf32>
    %19 = arith.addf %13, %18 : vector<2x128xf32>
    %c0_13 = arith.constant 0 : index
    %c3 = arith.constant 3 : index
    %c0_14 = arith.constant 0 : index
    %c0_15 = arith.constant 0 : index
    %20 = vector.load %arg2[%c0_13, %c3, %c0_14, %c0_15] : memref<1x4x2x128xf32, #tpu.memory_space<vmem>>, vector<1x1x2x128xf32>
    %21 = vector.shape_cast %20 : vector<1x1x2x128xf32> to vector<2x128xf32>
    %c3_16 = arith.constant 3 : index
    %22 = memref.load %arg3[%c3_16] : memref<16xf32, #tpu.memory_space<smem>>
    %23 = vector.broadcast %22 : f32 to vector<2x128xf32>
    %24 = arith.mulf %21, %23 : vector<2x128xf32>
    %25 = arith.addf %19, %24 : vector<2x128xf32>
    %c0_17 = arith.constant 0 : index
    %c0_18 = arith.constant 0 : index
    %c0_19 = arith.constant 0 : index
    %c0_20 = arith.constant 0 : index
    %26 = vector.load %arg5[%c0_17, %c0_18, %c0_19, %c0_20] : memref<1x4x2x128xf32, #tpu.memory_space<vmem>>, vector<1x1x2x128xf32>
    %27 = vector.shape_cast %26 : vector<1x1x2x128xf32> to vector<2x128xf32>
    %28 = vector.shape_cast %25 : vector<2x128xf32> to vector<1x1x2x128xf32>
    tpu.vector_store %arg5[%c0_17, %c0_18, %c0_19, %c0_20], %28 {strides = array<i32>} : memref<1x4x2x128xf32, #tpu.memory_space<vmem>>, vector<1x1x2x128xf32>,
    %c0_21 = arith.constant 0 : index
    %c0_22 = arith.constant 0 : index
    %c0_23 = arith.constant 0 : index
    %c0_24 = arith.constant 0 : index
    %29 = vector.load %arg2[%c0_21, %c0_22, %c0_23, %c0_24] : memref<1x4x2x128xf32, #tpu.memory_space<vmem>>, vector<1x1x2x128xf32>
    %30 = vector.shape_cast %29 : vector<1x1x2x128xf32> to vector<2x128xf32>
    %c4 = arith.constant 4 : index
    %31 = memref.load %arg3[%c4] : memref<16xf32, #tpu.memory_space<smem>>
    %32 = vector.broadcast %31 : f32 to vector<2x128xf32>
    %33 = arith.mulf %30, %32 : vector<2x128xf32>
    %c1_25 = arith.constant 1 : index
    %34 = memref.load %arg4[%c1_25] : memref<4xf32, #tpu.memory_space<smem>>
    %35 = vector.broadcast %34 : f32 to vector<2x128xf32>
    %36 = arith.addf %33, %35 : vector<2x128xf32>
    %c0_26 = arith.constant 0 : index
    %c1_27 = arith.constant 1 : index
    %c0_28 = arith.constant 0 : index
    %c0_29 = arith.constant 0 : index
    %37 = vector.load %arg2[%c0_26, %c1_27, %c0_28, %c0_29] : memref<1x4x2x128xf32, #tpu.memory_space<vmem>>, vector<1x1x2x128xf32>
    %38 = vector.shape_cast %37 : vector<1x1x2x128xf32> to vector<2x128xf32>
    %c5 = arith.constant 5 : index
    %39 = memref.load %arg3[%c5] : memref<16xf32, #tpu.memory_space<smem>>
    %40 = vector.broadcast %39 : f32 to vector<2x128xf32>
    %41 = arith.mulf %38, %40 : vector<2x128xf32>
    %42 = arith.addf %36, %41 : vector<2x128xf32>
    %c0_30 = arith.constant 0 : index
    %c2_31 = arith.constant 2 : index
    %c0_32 = arith.constant 0 : index
    %c0_33 = arith.constant 0 : index
    %43 = vector.load %arg2[%c0_30, %c2_31, %c0_32, %c0_33] : memref<1x4x2x128xf32, #tpu.memory_space<vmem>>, vector<1x1x2x128xf32>
    %44 = vector.shape_cast %43 : vector<1x1x2x128xf32> to vector<2x128xf32>
    %c6 = arith.constant 6 : index
    %45 = memref.load %arg3[%c6] : memref<16xf32, #tpu.memory_space<smem>>
    %46 = vector.broadcast %45 : f32 to vector<2x128xf32>
    %47 = arith.mulf %44, %46 : vector<2x128xf32>
    %48 = arith.addf %42, %47 : vector<2x128xf32>
    %c0_34 = arith.constant 0 : index
    %c3_35 = arith.constant 3 : index
    %c0_36 = arith.constant 0 : index
    %c0_37 = arith.constant 0 : index
    %49 = vector.load %arg2[%c0_34, %c3_35, %c0_36, %c0_37] : memref<1x4x2x128xf32, #tpu.memory_space<vmem>>, vector<1x1x2x128xf32>
    %50 = vector.shape_cast %49 : vector<1x1x2x128xf32> to vector<2x128xf32>
    %c7 = arith.constant 7 : index
    %51 = memref.load %arg3[%c7] : memref<16xf32, #tpu.memory_space<smem>>
    %52 = vector.broadcast %51 : f32 to vector<2x128xf32>
    %53 = arith.mulf %50, %52 : vector<2x128xf32>
    %54 = arith.addf %48, %53 : vector<2x128xf32>
    %c0_38 = arith.constant 0 : index
    %c1_39 = arith.constant 1 : index
    %c0_40 = arith.constant 0 : index
    %c0_41 = arith.constant 0 : index
    %55 = vector.load %arg5[%c0_38, %c1_39, %c0_40, %c0_41] : memref<1x4x2x128xf32, #tpu.memory_space<vmem>>, vector<1x1x2x128xf32>
    %56 = vector.shape_cast %55 : vector<1x1x2x128xf32> to vector<2x128xf32>
    %57 = vector.shape_cast %54 : vector<2x128xf32> to vector<1x1x2x128xf32>
    tpu.vector_store %arg5[%c0_38, %c1_39, %c0_40, %c0_41], %57 {strides = array<i32>} : memref<1x4x2x128xf32, #tpu.memory_space<vmem>>, vector<1x1x2x128xf32>,
    %c0_42 = arith.constant 0 : index
    %c0_43 = arith.constant 0 : index
    %c0_44 = arith.constant 0 : index
    %c0_45 = arith.constant 0 : index
    %58 = vector.load %arg2[%c0_42, %c0_43, %c0_44, %c0_45] : memref<1x4x2x128xf32, #tpu.memory_space<vmem>>, vector<1x1x2x128xf32>
    %59 = vector.shape_cast %58 : vector<1x1x2x128xf32> to vector<2x128xf32>
    %c8 = arith.constant 8 : index
    %60 = memref.load %arg3[%c8] : memref<16xf32, #tpu.memory_space<smem>>
    %61 = vector.broadcast %60 : f32 to vector<2x128xf32>
    %62 = arith.mulf %59, %61 : vector<2x128xf32>
    %c2_46 = arith.constant 2 : index
    %63 = memref.load %arg4[%c2_46] : memref<4xf32, #tpu.memory_space<smem>>
    %64 = vector.broadcast %63 : f32 to vector<2x128xf32>
    %65 = arith.addf %62, %64 : vector<2x128xf32>
    %c0_47 = arith.constant 0 : index
    %c1_48 = arith.constant 1 : index
    %c0_49 = arith.constant 0 : index
    %c0_50 = arith.constant 0 : index
    %66 = vector.load %arg2[%c0_47, %c1_48, %c0_49, %c0_50] : memref<1x4x2x128xf32, #tpu.memory_space<vmem>>, vector<1x1x2x128xf32>
    %67 = vector.shape_cast %66 : vector<1x1x2x128xf32> to vector<2x128xf32>
    %c9 = arith.constant 9 : index
    %68 = memref.load %arg3[%c9] : memref<16xf32, #tpu.memory_space<smem>>
    %69 = vector.broadcast %68 : f32 to vector<2x128xf32>
    %70 = arith.mulf %67, %69 : vector<2x128xf32>
    %71 = arith.addf %65, %70 : vector<2x128xf32>
    %c0_51 = arith.constant 0 : index
    %c2_52 = arith.constant 2 : index
    %c0_53 = arith.constant 0 : index
    %c0_54 = arith.constant 0 : index
    %72 = vector.load %arg2[%c0_51, %c2_52, %c0_53, %c0_54] : memref<1x4x2x128xf32, #tpu.memory_space<vmem>>, vector<1x1x2x128xf32>
    %73 = vector.shape_cast %72 : vector<1x1x2x128xf32> to vector<2x128xf32>
    %c10 = arith.constant 10 : index
    %74 = memref.load %arg3[%c10] : memref<16xf32, #tpu.memory_space<smem>>
    %75 = vector.broadcast %74 : f32 to vector<2x128xf32>
    %76 = arith.mulf %73, %75 : vector<2x128xf32>
    %77 = arith.addf %71, %76 : vector<2x128xf32>
    %c0_55 = arith.constant 0 : index
    %c3_56 = arith.constant 3 : index
    %c0_57 = arith.constant 0 : index
    %c0_58 = arith.constant 0 : index
    %78 = vector.load %arg2[%c0_55, %c3_56, %c0_57, %c0_58] : memref<1x4x2x128xf32, #tpu.memory_space<vmem>>, vector<1x1x2x128xf32>
    %79 = vector.shape_cast %78 : vector<1x1x2x128xf32> to vector<2x128xf32>
    %c11 = arith.constant 11 : index
    %80 = memref.load %arg3[%c11] : memref<16xf32, #tpu.memory_space<smem>>
    %81 = vector.broadcast %80 : f32 to vector<2x128xf32>
    %82 = arith.mulf %79, %81 : vector<2x128xf32>
    %83 = arith.addf %77, %82 : vector<2x128xf32>
    %c0_59 = arith.constant 0 : index
    %c2_60 = arith.constant 2 : index
    %c0_61 = arith.constant 0 : index
    %c0_62 = arith.constant 0 : index
    %84 = vector.load %arg5[%c0_59, %c2_60, %c0_61, %c0_62] : memref<1x4x2x128xf32, #tpu.memory_space<vmem>>, vector<1x1x2x128xf32>
    %85 = vector.shape_cast %84 : vector<1x1x2x128xf32> to vector<2x128xf32>
    %86 = vector.shape_cast %83 : vector<2x128xf32> to vector<1x1x2x128xf32>
    tpu.vector_store %arg5[%c0_59, %c2_60, %c0_61, %c0_62], %86 {strides = array<i32>} : memref<1x4x2x128xf32, #tpu.memory_space<vmem>>, vector<1x1x2x128xf32>,
    %c0_63 = arith.constant 0 : index
    %c0_64 = arith.constant 0 : index
    %c0_65 = arith.constant 0 : index
    %c0_66 = arith.constant 0 : index
    %87 = vector.load %arg2[%c0_63, %c0_64, %c0_65, %c0_66] : memref<1x4x2x128xf32, #tpu.memory_space<vmem>>, vector<1x1x2x128xf32>
    %88 = vector.shape_cast %87 : vector<1x1x2x128xf32> to vector<2x128xf32>
    %c12 = arith.constant 12 : index
    %89 = memref.load %arg3[%c12] : memref<16xf32, #tpu.memory_space<smem>>
    %90 = vector.broadcast %89 : f32 to vector<2x128xf32>
    %91 = arith.mulf %88, %90 : vector<2x128xf32>
    %c3_67 = arith.constant 3 : index
    %92 = memref.load %arg4[%c3_67] : memref<4xf32, #tpu.memory_space<smem>>
    %93 = vector.broadcast %92 : f32 to vector<2x128xf32>
    %94 = arith.addf %91, %93 : vector<2x128xf32>
    %c0_68 = arith.constant 0 : index
    %c1_69 = arith.constant 1 : index
    %c0_70 = arith.constant 0 : index
    %c0_71 = arith.constant 0 : index
    %95 = vector.load %arg2[%c0_68, %c1_69, %c0_70, %c0_71] : memref<1x4x2x128xf32, #tpu.memory_space<vmem>>, vector<1x1x2x128xf32>
    %96 = vector.shape_cast %95 : vector<1x1x2x128xf32> to vector<2x128xf32>
    %c13 = arith.constant 13 : index
    %97 = memref.load %arg3[%c13] : memref<16xf32, #tpu.memory_space<smem>>
    %98 = vector.broadcast %97 : f32 to vector<2x128xf32>
    %99 = arith.mulf %96, %98 : vector<2x128xf32>
    %100 = arith.addf %94, %99 : vector<2x128xf32>
    %c0_72 = arith.constant 0 : index
    %c2_73 = arith.constant 2 : index
    %c0_74 = arith.constant 0 : index
    %c0_75 = arith.constant 0 : index
    %101 = vector.load %arg2[%c0_72, %c2_73, %c0_74, %c0_75] : memref<1x4x2x128xf32, #tpu.memory_space<vmem>>, vector<1x1x2x128xf32>
    %102 = vector.shape_cast %101 : vector<1x1x2x128xf32> to vector<2x128xf32>
    %c14 = arith.constant 14 : index
    %103 = memref.load %arg3[%c14] : memref<16xf32, #tpu.memory_space<smem>>
    %104 = vector.broadcast %103 : f32 to vector<2x128xf32>
    %105 = arith.mulf %102, %104 : vector<2x128xf32>
    %106 = arith.addf %100, %105 : vector<2x128xf32>
    %c0_76 = arith.constant 0 : index
    %c3_77 = arith.constant 3 : index
    %c0_78 = arith.constant 0 : index
    %c0_79 = arith.constant 0 : index
    %107 = vector.load %arg2[%c0_76, %c3_77, %c0_78, %c0_79] : memref<1x4x2x128xf32, #tpu.memory_space<vmem>>, vector<1x1x2x128xf32>
    %108 = vector.shape_cast %107 : vector<1x1x2x128xf32> to vector<2x128xf32>
    %c15 = arith.constant 15 : index
    %109 = memref.load %arg3[%c15] : memref<16xf32, #tpu.memory_space<smem>>
    %110 = vector.broadcast %109 : f32 to vector<2x128xf32>
    %111 = arith.mulf %108, %110 : vector<2x128xf32>
    %112 = arith.addf %106, %111 : vector<2x128xf32>
    %c0_80 = arith.constant 0 : index
    %c3_81 = arith.constant 3 : index
    %c0_82 = arith.constant 0 : index
    %c0_83 = arith.constant 0 : index
    %113 = vector.load %arg5[%c0_80, %c3_81, %c0_82, %c0_83] : memref<1x4x2x128xf32, #tpu.memory_space<vmem>>, vector<1x1x2x128xf32>
    %114 = vector.shape_cast %113 : vector<1x1x2x128xf32> to vector<2x128xf32>
    %115 = vector.shape_cast %112 : vector<2x128xf32> to vector<1x1x2x128xf32>
    tpu.vector_store %arg5[%c0_80, %c3_81, %c0_82, %c0_83], %115 {strides = array<i32>} : memref<1x4x2x128xf32, #tpu.memory_space<vmem>>, vector<1x1x2x128xf32>,
    return
  }
  func.func @transform_0(%arg0: i32, %arg1: i32) -> (i32, i32, i32, i32) {
    %c0_i32 = arith.constant 0 : i32
    %c0_i32_0 = arith.constant 0 : i32
    %c0_i32_1 = arith.constant 0 : i32
    return %arg0, %c0_i32, %arg1, %c0_i32_0 : i32, i32, i32, i32
  }
  func.func @transform_1(%arg0: i32, %arg1: i32) -> i32 {
    %c0_i32 = arith.constant 0 : i32
    %c0_i32_0 = arith.constant 0 : i32
    return %c0_i32 : i32
  }
  func.func @transform_2(%arg0: i32, %arg1: i32) -> i32 {
    %c0_i32 = arith.constant 0 : i32
    %c0_i32_0 = arith.constant 0 : i32
    return %c0_i32 : i32
  }
  func.func @transform_3(%arg0: i32, %arg1: i32) -> (i32, i32, i32, i32) {
    %c0_i32 = arith.constant 0 : i32
    %c0_i32_0 = arith.constant 0 : i32
    %c0_i32_1 = arith.constant 0 : i32
    return %arg0, %c0_i32, %arg1, %c0_i32_0 : i32, i32, i32, i32
  }
}

</mosaic_0001>

<llo_original>
// kernel: squeeze.1
$region0: #{squeeze.1}
  %s0 = inlined_call_operand.vmem [shape: f32[4,4], index: 0, kind: input, shape index: {}]
  %s1 = inlined_call_operand.vmem [shape: f32[16], index: 1, kind: output, shape index: {}]
  $region1: #{squeeze.1} parent=0
    #allocation0 [shape = 'u8[4096]{0}', space=vmem, size = 0x1000, scoped, tag = 'scoped mem for output reshape']
    #allocation1 [shape = 'u8[4096]{0}', space=vmem, size = 0x1000, scoped, tag = 'scoped mem for input reshape']
    %s3 = sshllo.u32 0, 4
    %v4 = vld [vmem:[%s0] sm:%s3]
    %5 = vst [vmem:[#allocation1] sm:%s3] %v4
    %v6 = vld [vmem:[#allocation1] sm:$0x1]
    %vm7 = vcmask 31744
    %8 = vst.msk [vmem:[#allocation0] sm:$0x1] %vm7, %v6
    %s9 = scalar_lea.vmem [#allocation1], 3
    %v10 = vld [vmem:[%s9] sm:$0x1]
    %11 = vrot.lane.b32.xlu0 %v10, 12
    %v12 = vpop.permute.xlu0 %11
    %vm13 = vcmask 130144
    %14 = vst.msk [vmem:[#allocation0] sm:$0x1] %vm13, %v12
    %s15 = scalar_lea.vmem [#allocation1], 2
    %v16 = vld [vmem:[%s15] sm:$0x1]
    %17 = vrot.lane.b32.xlu0 %v16, 8
    %v18 = vpop.permute.xlu0 %17
    %vm19 = vcmask 97344
    %20 = vst.msk [vmem:[#allocation0] sm:$0x1] %vm19, %v18
    %s21 = scalar_lea.vmem [#allocation1], 1
    %v22 = vld [vmem:[%s21] sm:$0x1]
    %23 = vrot.lane.b32.xlu0 %v22, 4
    %v24 = vpop.permute.xlu0 %23
    %vm25 = vcmask 64544
    %26 = vst.msk [vmem:[#allocation0] sm:$0x1] %vm25, %v24
    %s28 = sshllo.u32 0, 1
    %v30 = vld [vmem:[#allocation0] sm:%s28]
    %s31 = sshllo.u32 0, 1
    %32 = vst [vmem:[%s1] sm:%s31] %v30

// kernel: conv1x1_nchw_pallas.1
$region0: #{conv1x1_nchw_pallas.1}
  #allocation0 [shape = 'u32[]', space=smem, size = 0x4, offset = 0x4, fixed_abs, tag = 'smem constant byte address 0x4 - core index']
  #allocation1 [shape = 'u32[144,128]{1,0:T(1,128)}', space=vmem, size = 0x12000, scoped, tag = 'internal scratch']
  %s0 = inlined_call_operand.vmem [shape: f32[2,4,2,128], index: 0, kind: input, shape index: {}]
  %s1 = inlined_call_operand.vmem [shape: f32[16], index: 1, kind: input, shape index: {}]
  %s2 = inlined_call_operand.vmem [shape: f32[4], index: 2, kind: input, shape index: {}]
  %s3 = inlined_call_operand.vmem [shape: f32[2,4,2,128], index: 3, kind: output, shape index: {}]
  %s4 = sld [smem:[#allocation0]]
  $region53: #{conv1x1_nchw_pallas.1} parent=0
    _
  %s6 = ssub.s32 1, %s4
  %s7 = scalar_select 0, %s6, %s4
  $region1: #{conv1x1_nchw_pallas.1} parent=0
    #allocation2 [shape = 'u8[512]{0}', space=smem, size = 0x200, scoped, tag = 'input window, operand 1, single buffered']
    #allocation3 [shape = 's32[2]{0}', space=sflag, size = 0x8, scoped, tag = 'scoped memory for conv1x1_nchw_pallas.1']
    #allocation4 [shape = 'u8[512]{0}', space=smem, size = 0x200, scoped, tag = 'input window, operand 2, single buffered']
    #allocation5 [shape = 's32[1]{0}', space=sflag, size = 0x4, scoped, tag = 'scoped memory for conv1x1_nchw_pallas.1']
    %8 = vsyncpa [#allocation3], 0
    %9 = vsyncpa [#allocation5], 0
    loop: start=0, step=1, limit=4
    $region2: #{conv1x1_nchw_pallas.1} parent=1 // loop_pre_header
      _
    $region3: #{conv1x1_nchw_pallas.1} parent=1 // loop_header
      %s11 = sphi 0, %s15
      %p12 = scmp.ge.s32.totalorder %s11, 4
      %s18 = sphi 0, %s30
      %s19 = sphi 0, %s26
      %s20 = sphi 0, %s18
      %s21 = sphi 0, %s19
      %s22 = sphi 0, %s20
      %s23 = sphi 0, %s21
      %s35 = sphi 0, %s37
      %s38 = sphi 0, %s35
      %s39 = sphi 0, %s38
      %s55 = sphi 0, %s39
      %s59 = sphi 0, %s59
      %s61 = sphi 0, %s59
      %s62 = sphi 0, %s61
      %s76 = sphi 0, %s62
      %s80 = sphi 0, %s80
      %s82 = sphi 0, %s80
      %s83 = sphi 0, %s82
      %s97 = sphi 0, %s83
      %s105 = sphi 0, %s107
      %s108 = sphi 0, %s105
      %s109 = sphi 0, %s108
      %s125 = sphi 0, %s109
    $region4: #{conv1x1_nchw_pallas.1} parent=1 // loop_header_branch
      %14 = sbr.rel (%p12) target = $region8
    $region5: #{conv1x1_nchw_pallas.1} parent=1 // loop_body
      %s16 = ssub.s32 %s11, 1
      %s17 = ssub.s32 %s11, 2
      %s24 = sadd.s32 1, %s19
      %p25 = scmp.ge.s32.totalorder %s24, 1
      %s26 = scalar_select %p25, 0, %s24
      %s27 = sadd.s32 1, %s18
      %s28 = scalar_select %p25, %s27, %s18
      %p29 = scmp.ge.s32.totalorder %s28, 2
      %s30 = scalar_select %p29, 0, %s28
      %s31 = ssub.s32 %s18, %s30
      %s32 = ssub.s32 %s19, %s26
      %s33 = sor.u32 %s31, %s32
      %p34 = scmp.eq.s32.totalorder %s33, 0
      %s36 = sadd.s32 %s35, 1
      %s37 = scalar_select %p34, %s35, %s36
      %p40 = pneg %p34
      %p41 = scmp.eq.s32.totalorder %s11, 1
      %p42 = por %p40, %p41
      %p43 = scmp.ne.s32.totalorder %s35, %s38
      %p44 = scmp.eq.s32.totalorder %s11, 0
      %p45 = por %p43, %p44
      %p46 = scmp.ne.s32.totalorder %s35, %s38
      %p47 = scmp.eq.s32.totalorder %s16, 1
      %p48 = por %p46, %p47
      %p49 = scmp.ne.s32.totalorder %s38, %s39
      %p50 = scmp.eq.s32.totalorder %s16, 0
      %p51 = por %p49, %p50
      %p52 = scmp.ne.s32.totalorder %s38, %s39
      %p53 = scmp.eq.s32.totalorder %s17, 1
      %p54 = por %p52, %p53
      %p56 = scmp.ne.s32.totalorder %s39, %s55
      %p57 = scmp.eq.s32.totalorder %s17, 0
      %p58 = por %p56, %p57
      %s60 = sadd.s32 %s59, 1
      %p63 = scmp.eq.s32.totalorder %s11, 1
      %p64 = scmp.ne.s32.totalorder %s59, %s61
      %p65 = scmp.eq.s32.totalorder %s11, 0
      %p66 = por %p64, %p65
      %p67 = scmp.ne.s32.totalorder %s59, %s61
      %p68 = scmp.eq.s32.totalorder %s16, 1
      %p69 = por %p67, %p68
      %p70 = scmp.ne.s32.totalorder %s61, %s62
      %p71 = scmp.eq.s32.totalorder %s16, 0
      %p72 = por %p70, %p71
      %p73 = scmp.ne.s32.totalorder %s61, %s62
      %p74 = scmp.eq.s32.totalorder %s17, 1
      %p75 = por %p73, %p74
      %p77 = scmp.ne.s32.totalorder %s62, %s76
      %p78 = scmp.eq.s32.totalorder %s17, 0
      %p79 = por %p77, %p78
      %s81 = sadd.s32 %s80, 1
      %p84 = scmp.eq.s32.totalorder %s11, 1
      %p85 = scmp.ne.s32.totalorder %s80, %s82
      %p86 = scmp.eq.s32.totalorder %s11, 0
      %p87 = por %p85, %p86
      %p88 = scmp.ne.s32.totalorder %s80, %s82
      %p89 = scmp.eq.s32.totalorder %s16, 1
      %p90 = por %p88, %p89
      %p91 = scmp.ne.s32.totalorder %s82, %s83
      %p92 = scmp.eq.s32.totalorder %s16, 0
      %p93 = por %p91, %p92
      %p94 = scmp.ne.s32.totalorder %s82, %s83
      %p95 = scmp.eq.s32.totalorder %s17, 1
      %p96 = por %p94, %p95
      %p98 = scmp.ne.s32.totalorder %s83, %s97
      %p99 = scmp.eq.s32.totalorder %s17, 0
      %p100 = por %p98, %p99
      %s101 = ssub.s32 %s18, %s30
      %s102 = ssub.s32 %s19, %s26
      %s103 = sor.u32 %s101, %s102
      %p104 = scmp.eq.s32.totalorder %s103, 0
      %s106 = sadd.s32 %s105, 1
      %s107 = scalar_select %p104, %s105, %s106
      %p110 = pneg %p104
      %p111 = scmp.eq.s32.totalorder %s11, 1
      %p112 = por %p110, %p111
      %p113 = scmp.ne.s32.totalorder %s105, %s108
      %p114 = scmp.eq.s32.totalorder %s11, 0
      %p115 = por %p113, %p114
      %p116 = scmp.ne.s32.totalorder %s105, %s108
      %p117 = scmp.eq.s32.totalorder %s16, 1
      %p118 = por %p116, %p117
      %p119 = scmp.ne.s32.totalorder %s108, %s109
      %p120 = scmp.eq.s32.totalorder %s16, 0
      %p121 = por %p119, %p120
      %p122 = scmp.ne.s32.totalorder %s108, %s109
      %p123 = scmp.eq.s32.totalorder %s17, 1
      %p124 = por %p122, %p123
      %p126 = scmp.ne.s32.totalorder %s109, %s125
      %p127 = scmp.eq.s32.totalorder %s17, 0
      %p128 = por %p126, %p127
      %p129 = scmp.le.s32.totalorder 1, %s11
      %p130 = scmp.lt.s32.totalorder %s11, 3
      %p131 = pnand %p129, %p130
      %p132 = pneg %p131
      // Predicated region
      $region9: #{conv1x1_nchw_pallas.1} parent=5 // pred_check
        _
      $region10: #{conv1x1_nchw_pallas.1} parent=5 // pred_check_branch
        %134 = sbr.rel (%p131) target = $region12
      $region11: #{conv1x1_nchw_pallas.1} parent=5 // pred_region
        %s135 = ssub.s32 %s11, 1
        // Predicated region
        $region13: #{conv1x1_nchw_pallas.1} parent=11 // pred_check
          %p136 = pneg %p72
        $region14: #{conv1x1_nchw_pallas.1} parent=11 // pred_check_branch
          %138 = sbr.rel (%p136) target = $region16
        $region15: #{conv1x1_nchw_pallas.1} parent=11 // pred_region
          %s140 = ssub.s32 16, 16
          %141 = vsyncadd [#allocation3], %s140
          %s143 = sshll.u32 %s1, 4
          %s144 = int_to_ptr.vmem [resolvable:$true] %s143
          %146 = dma.vmem_to_smem %s144, 16, [#allocation2], [#allocation3]
        $region16: #{conv1x1_nchw_pallas.1} parent=11 // pred_fallthru
          _
        // Predicated region
        $region17: #{conv1x1_nchw_pallas.1} parent=11 // pred_check
          %p147 = pneg %p93
        $region18: #{conv1x1_nchw_pallas.1} parent=11 // pred_check_branch
          %149 = sbr.rel (%p147) target = $region20
        $region19: #{conv1x1_nchw_pallas.1} parent=11 // pred_region
          %s151 = ssub.s32 16, 16
          %152 = vsyncadd [#allocation5], %s151
          %s154 = sshll.u32 %s2, 4
          %s155 = int_to_ptr.vmem [resolvable:$true] %s154
          %157 = dma.vmem_to_smem %s155, 16, [#allocation4], [#allocation5]
        $region20: #{conv1x1_nchw_pallas.1} parent=11 // pred_fallthru
          _
      $region12: #{conv1x1_nchw_pallas.1} parent=5 // pred_fallthru
        _
      %p158 = scmp.lt.s32.totalorder %s11, 2
      // Predicated region
      $region21: #{conv1x1_nchw_pallas.1} parent=5 // pred_check
        %p159 = pneg %p158
      $region22: #{conv1x1_nchw_pallas.1} parent=5 // pred_check_branch
        %161 = sbr.rel (%p159) target = $region24
      $region23: #{conv1x1_nchw_pallas.1} parent=5 // pred_region
        // Predicated region
        $region25: #{conv1x1_nchw_pallas.1} parent=23 // pred_check
          %p162 = pneg %p45
        $region26: #{conv1x1_nchw_pallas.1} parent=23 // pred_check_branch
          %164 = sbr.rel (%p162) target = $region28
        $region27: #{conv1x1_nchw_pallas.1} parent=23 // pred_region
          %p165 = scmp.lt.s32.totalorder %s18, 1
          %s166 = scalar_select %p165, %s18, 1
          %p167 = scmp.lt.s32.totalorder %s19, 0
          %s168 = scalar_select %p167, %s19, 0
          %s169 = smul.addr %s166, 4
          %s170 = sadd.s32 %s168, %s169
          %s171 = smul.addr %s170, 2
          %s172 = scalar_lea.vmem %s0, %s171
        $region28: #{conv1x1_nchw_pallas.1} parent=23 // pred_fallthru
          _
      $region24: #{conv1x1_nchw_pallas.1} parent=5 // pred_fallthru
        _
      %p173 = scmp.le.s32.totalorder 1, %s11
      %p174 = scmp.lt.s32.totalorder %s11, 3
      %p175 = pnand %p173, %p174
      %p176 = pneg %p175
      // Predicated region
      $region29: #{conv1x1_nchw_pallas.1} parent=5 // pred_check
        _
      $region30: #{conv1x1_nchw_pallas.1} parent=5 // pred_check_branch
        %178 = sbr.rel (%p175) target = $region32
      $region31: #{conv1x1_nchw_pallas.1} parent=5 // pred_region
        %s179 = ssub.s32 %s11, 1
        // Predicated region
        $region33: #{conv1x1_nchw_pallas.1} parent=31 // pred_check
          %p180 = pneg %p72
        $region34: #{conv1x1_nchw_pallas.1} parent=31 // pred_check_branch
          %182 = sbr.rel (%p180) target = $region36
        $region35: #{conv1x1_nchw_pallas.1} parent=31 // pred_region
          %183 = dma.done [#allocation3], 16
        $region36: #{conv1x1_nchw_pallas.1} parent=31 // pred_fallthru
          _
        // Predicated region
        $region37: #{conv1x1_nchw_pallas.1} parent=31 // pred_check
          %p184 = pneg %p93
        $region38: #{conv1x1_nchw_pallas.1} parent=31 // pred_check_branch
          %186 = sbr.rel (%p184) target = $region40
        $region39: #{conv1x1_nchw_pallas.1} parent=31 // pred_region
          %187 = dma.done [#allocation5], 16
        $region40: #{conv1x1_nchw_pallas.1} parent=31 // pred_fallthru
          _
        %188 = sfence
        %p189 = scmp.lt.s32.totalorder %s20, 1
        %s190 = scalar_select %p189, %s20, 1
        %p191 = scmp.lt.s32.totalorder %s21, 0
        %s192 = scalar_select %p191, %s21, 0
        %s193 = smul.addr %s190, 4
        %s194 = sadd.s32 %s192, %s193
        %s195 = smul.addr %s194, 2
        %s196 = scalar_lea.vmem %s0, %s195
        %p197 = pneg %p51
        %p198 = pneg %p48
        %p199 = pneg %p72
        %p200 = pneg %p69
        %p201 = pneg %p93
        %p202 = pneg %p90
        %p203 = pneg %p121
        %p204 = pneg %p118
        %p205 = scmp.lt.s32.totalorder %s20, 1
        %s206 = scalar_select %p205, %s20, 1
        %p207 = scmp.lt.s32.totalorder %s21, 0
        %s208 = scalar_select %p207, %s21, 0
        %s209 = smul.addr %s206, 4
        %s210 = sadd.s32 %s208, %s209
        %s211 = smul.addr %s210, 2
        %s212 = scalar_lea.vmem %s3, %s211
        %p213 = scmp.lt.s32.totalorder %s20, 1
        %s214 = scalar_select %p213, %s20, 1
        %p215 = scmp.lt.s32.totalorder %s21, 0
        %s216 = scalar_select %p215, %s21, 0
        %s217 = smul.addr %s214, 4
        %s218 = sadd.s32 %s216, %s217
        %s219 = smul.addr %s218, 2
        %s220 = scalar_lea.vmem %s0, %s219
        %p221 = scmp.lt.s32.totalorder %s20, 1
        %s222 = scalar_select %p221, %s20, 1
        %p223 = scmp.lt.s32.totalorder %s21, 0
        %s224 = scalar_select %p223, %s21, 0
        %s225 = smul.addr %s222, 4
        %s226 = sadd.s32 %s224, %s225
        %s227 = smul.addr %s226, 2
        %s228 = scalar_lea.vmem %s3, %s227
        %v229 = vld [vmem:[%s220] sm:$0x3]
        %s230 = sld [smem:[#allocation2]]
        %v231 = vstv %s230
        %v232 = vmul.f32 %v229, %v231
        %s233 = sld [smem:[#allocation4]]
        %v234 = vstv %s233
        %v235 = vadd.f32 %v232, %v234
        %s236 = scalar_lea.vmem %s220, 2
        %v237 = vld [vmem:[%s236] sm:$0x3]
        %s238 = sld [smem:[#allocation2 + $0x1]]
        %v239 = vstv %s238
        %v240 = vmul.f32 %v237, %v239
        %v241 = vadd.f32 %v235, %v240
        %s242 = scalar_lea.vmem %s220, 4
        %v243 = vld [vmem:[%s242] sm:$0x3]
        %s244 = sld [smem:[#allocation2 + $0x2]]
        %v245 = vstv %s244
        %v246 = vmul.f32 %v243, %v245
        %v247 = vadd.f32 %v241, %v246
        %s248 = scalar_lea.vmem %s220, 6
        %v249 = vld [vmem:[%s248] sm:$0x3]
        %s250 = sld [smem:[#allocation2 + $0x3]]
        %v251 = vstv %s250
        %v252 = vmul.f32 %v249, %v251
        %v253 = vadd.f32 %v247, %v252
        %254 = vst [vmem:[%s228] sm:$0x3] %v253
        %v255 = vld [vmem:[%s220] sm:$0x3]
        %s256 = sld [smem:[#allocation2 + $0x4]]
        %v257 = vstv %s256
        %v258 = vmul.f32 %v255, %v257
        %s259 = sld [smem:[#allocation4 + $0x1]]
        %v260 = vstv %s259
        %v261 = vadd.f32 %v258, %v260
        %v262 = vld [vmem:[%s236] sm:$0x3]
        %s263 = sld [smem:[#allocation2 + $0x5]]
        %v264 = vstv %s263
        %v265 = vmul.f32 %v262, %v264
        %v266 = vadd.f32 %v261, %v265
        %v267 = vld [vmem:[%s242] sm:$0x3]
        %s268 = sld [smem:[#allocation2 + $0x6]]
        %v269 = vstv %s268
        %v270 = vmul.f32 %v267, %v269
        %v271 = vadd.f32 %v266, %v270
        %v272 = vld [vmem:[%s248] sm:$0x3]
        %s273 = sld [smem:[#allocation2 + $0x7]]
        %v274 = vstv %s273
        %v275 = vmul.f32 %v272, %v274
        %v276 = vadd.f32 %v271, %v275
        %s277 = scalar_lea.vmem %s228, 2
        %278 = vst [vmem:[%s277] sm:$0x3] %v276
        %v279 = vld [vmem:[%s220] sm:$0x3]
        %s280 = sld [smem:[#allocation2 + $0x8]]
        %v281 = vstv %s280
        %v282 = vmul.f32 %v279, %v281
        %s283 = sld [smem:[#allocation4 + $0x2]]
        %v284 = vstv %s283
        %v285 = vadd.f32 %v282, %v284
        %v286 = vld [vmem:[%s236] sm:$0x3]
        %s287 = sld [smem:[#allocation2 + $0x9]]
        %v288 = vstv %s287
        %v289 = vmul.f32 %v286, %v288
        %v290 = vadd.f32 %v285, %v289
        %v291 = vld [vmem:[%s242] sm:$0x3]
        %s292 = sld [smem:[#allocation2 + $0xa]]
        %v293 = vstv %s292
        %v294 = vmul.f32 %v291, %v293
        %v295 = vadd.f32 %v290, %v294
        %v296 = vld [vmem:[%s248] sm:$0x3]
        %s297 = sld [smem:[#allocation2 + $0xb]]
        %v298 = vstv %s297
        %v299 = vmul.f32 %v296, %v298
        %v300 = vadd.f32 %v295, %v299
        %s301 = scalar_lea.vmem %s228, 4
        %302 = vst [vmem:[%s301] sm:$0x3] %v300
        %v303 = vld [vmem:[%s220] sm:$0x3]
        %s304 = sld [smem:[#allocation2 + $0xc]]
        %v305 = vstv %s304
        %v306 = vmul.f32 %v303, %v305
        %s307 = sld [smem:[#allocation4 + $0x3]]
        %v308 = vstv %s307
        %v309 = vadd.f32 %v306, %v308
        %v310 = vld [vmem:[%s236] sm:$0x3]
        %s311 = sld [smem:[#allocation2 + $0xd]]
        %v312 = vstv %s311
        %v313 = vmul.f32 %v310, %v312
        %v314 = vadd.f32 %v309, %v313
        %v315 = vld [vmem:[%s242] sm:$0x3]
        %s316 = sld [smem:[#allocation2 + $0xe]]
        %v317 = vstv %s316
        %v318 = vmul.f32 %v315, %v317
        %v319 = vadd.f32 %v314, %v318
        %v320 = vld [vmem:[%s248] sm:$0x3]
        %s321 = sld [smem:[#allocation2 + $0xf]]
        %v322 = vstv %s321
        %v323 = vmul.f32 %v320, %v322
        %v324 = vadd.f32 %v319, %v323
        %s325 = scalar_lea.vmem %s228, 6
        %326 = vst [vmem:[%s325] sm:$0x3] %v324
        %p327 = scmp.lt.s32.totalorder %s20, 1
        %s328 = scalar_select %p327, %s20, 1
        %p329 = scmp.lt.s32.totalorder %s21, 0
        %s330 = scalar_select %p329, %s21, 0
        %s331 = smul.addr %s328, 4
        %s332 = sadd.s32 %s330, %s331
        %s333 = smul.addr %s332, 2
        %s334 = scalar_lea.vmem %s3, %s333
        // Predicated region
        $region41: #{conv1x1_nchw_pallas.1} parent=31 // pred_check
          %p335 = pneg %p118
        $region42: #{conv1x1_nchw_pallas.1} parent=31 // pred_check_branch
          %337 = sbr.rel (%p335) target = $region44
        $region43: #{conv1x1_nchw_pallas.1} parent=31 // pred_region
          _
        $region44: #{conv1x1_nchw_pallas.1} parent=31 // pred_fallthru
          _
      $region32: #{conv1x1_nchw_pallas.1} parent=5 // pred_fallthru
        _
      %p338 = scmp.le.s32.totalorder 2, %s11
      // Predicated region
      $region45: #{conv1x1_nchw_pallas.1} parent=5 // pred_check
        %p339 = pneg %p338
      $region46: #{conv1x1_nchw_pallas.1} parent=5 // pred_check_branch
        %341 = sbr.rel (%p339) target = $region48
      $region47: #{conv1x1_nchw_pallas.1} parent=5 // pred_region
        %s342 = ssub.s32 %s11, 2
        // Predicated region
        $region49: #{conv1x1_nchw_pallas.1} parent=47 // pred_check
          %p343 = pneg %p124
        $region50: #{conv1x1_nchw_pallas.1} parent=47 // pred_check_branch
          %345 = sbr.rel (%p343) target = $region52
        $region51: #{conv1x1_nchw_pallas.1} parent=47 // pred_region
          %p346 = scmp.lt.s32.totalorder %s22, 1
          %s347 = scalar_select %p346, %s22, 1
          %p348 = scmp.lt.s32.totalorder %s23, 0
          %s349 = scalar_select %p348, %s23, 0
          %s350 = smul.addr %s347, 4
          %s351 = sadd.s32 %s349, %s350
          %s352 = smul.addr %s351, 2
          %s353 = scalar_lea.vmem %s3, %s352
        $region52: #{conv1x1_nchw_pallas.1} parent=47 // pred_fallthru
          _
      $region48: #{conv1x1_nchw_pallas.1} parent=5 // pred_fallthru
        _
    $region6: #{conv1x1_nchw_pallas.1} parent=1 // loop_footer
      %s15 = sadd.s32 1, %s11
    $region7: #{conv1x1_nchw_pallas.1} parent=1 // loop_footer_branch
      %10 = sbr.rel target = $region3
    $region8: #{conv1x1_nchw_pallas.1} parent=1 // loop_exit
      _
    %354 = vsyncpa [#allocation3], 1
    %s355 = scalar_lea.sflag [#allocation3], 1
    %356 = vsyncpa %s355, 1
    %357 = vsyncpa [#allocation5], 1

</llo_original>
